<compile_context>
chip_gen: v6e
topology: v6e:2x2x1
jax: 0.10.0
libtpu: 0.0.40
codegen_flags: <defaults>
</compile_context>

<pallas_src>
import functools

import jax
import jax.numpy as jnp
from jax.experimental import pallas as pl
from jax.experimental.pallas import tpu as pltpu


def _round_up(a: int, b: int) -> int:
    return (a + b - 1) // b * b


def _ls_ce_kernel(x_ref, t_ref, loss_ref, *, n_true, tile_n, c,
                  confidence, smoothing, ragged):
    # Load tile in its native dtype; cast once, all math in f32.
    xf = x_ref[...].astype(jnp.float32)          # (tile_n, C)
    t = t_ref[...]                               # (tile_n, 1) int32

    # Row-wise pieces of log_softmax (logprobs never materialized).
    m = jnp.max(xf, axis=-1, keepdims=True)                                 # (tile_n, 1)
    lse = jnp.log(jnp.sum(jnp.exp(xf - m), axis=-1, keepdims=True))         # (tile_n, 1)

    # Gather x[i, t_i] via a masked sum (no dynamic lane gather on TPU).
    col = jax.lax.broadcasted_iota(jnp.int32, xf.shape, 1)
    x_t = jnp.sum(jnp.where(col == t, xf, 0.0), axis=-1, keepdims=True)     # (tile_n, 1)
    x_sum = jnp.sum(xf, axis=-1, keepdims=True)                             # (tile_n, 1)

    # loss_i = conf*(m+lse-x_t) + smooth*(m+lse-mean_x) = (m+lse) - conf*x_t - (smooth/C)*sum_x
    loss = (m + lse) - confidence * x_t - (smoothing / c) * x_sum           # (tile_n, 1)

    if ragged:  # static: only emitted when N % tile_n != 0
        i = pl.program_id(0)
        row = jax.lax.broadcasted_iota(jnp.int32, loss.shape, 0) + i * tile_n
        # Must remain a select (NOT a multiply): OOB rows hold undefined data
        # that may be NaN/Inf; the select discards it exactly.
        loss = jnp.where(row < n_true, loss, 0.0)

    loss_ref[...] = loss


def label_smoothing_cross_entropy(x, target, smoothing=0.1, tile_n=None):
    """x: (N, C) float logits (f32 or bf16), target: (N,) int class indices -> scalar f32."""
    n, c = x.shape
    confidence = 1.0 - smoothing
    itemsize = jnp.dtype(x.dtype).itemsize

    # Sublane granularity by dtype: 8 for f32, 16 for bf16, 32 for int8/fp8.
    row_align = max(8, 32 // itemsize)

    if tile_n is None:
        # ~1.5M elements per tile == ~6 MiB of f32 working set.  Double-buffered
        # native-dtype input tiles plus a few f32 temporaries stay comfortably
        # under the 48 MiB VMEM budget below even on v7x (64 MiB physical),
        # while keeping per-step DMA time >> the ~0.35 us grid-step overhead.
        max_elems = 1536 * 1024
        tile_n = max(row_align, min(max_elems // max(c, 1), n))
    tile_n = _round_up(min(tile_n, _round_up(n, row_align)), row_align)

    num_tiles = pl.cdiv(n, tile_n)
    n_pad = num_tiles * tile_n
    ragged = n_pad != n

    # Targets reshaped (no padding of either input: no extra HBM copies).
    t2 = target.astype(jnp.int32).reshape(n, 1)

    kernel = functools.partial(
        _ls_ce_kernel,
        n_true=n, tile_n=tile_n, c=c,
        confidence=confidence, smoothing=smoothing, ragged=ragged)

    cost = pl.CostEstimate(
        flops=5 * n * c,
        transcendentals=n * c,
        bytes_accessed=n * c * itemsize + n * 4 + n_pad * 4,
    )

    per_row = pl.pallas_call(
        kernel,
        out_shape=jax.ShapeDtypeStruct((n_pad, 1), jnp.float32),
        grid_spec=pltpu.PrefetchScalarGridSpec(
            num_scalar_prefetch=0,
            grid=(num_tiles,),
            in_specs=[
                pl.BlockSpec((tile_n, c), lambda i: (i, 0)),
                pl.BlockSpec((tile_n, 1), lambda i: (i, 0)),
            ],
            out_specs=pl.BlockSpec((tile_n, 1), lambda i: (i, 0)),
        ),
        compiler_params=pltpu.CompilerParams(
            # Each tile writes its own output block -> fully parallel grid
            # (v7x dual-TC splits it; neutral on single-TC v5e/v6e).
            dimension_semantics=("parallel",),
            # Larger tiles need more than the default scoped VMEM on v5e (16 MiB)
            # and v6e/v7x (32 MiB); 48 MiB still fits v7x's 64 MiB physical.
            vmem_limit_bytes=48 * 1024 * 1024,
        ),
        cost_estimate=cost,
    )(x, t2)

    # Padded rows were zeroed in-kernel; tiny O(N) reduction done in JAX.
    return jnp.sum(per_row) * (1.0 / n)


def _reference(x, target, smoothing=0.1):
    confidence = 1.0 - smoothing
    logprobs = jax.nn.log_softmax(x.astype(jnp.float32), axis=-1)
    nll = -jnp.take_along_axis(logprobs, target[:, None], axis=-1)[:, 0]
    smooth = -jnp.mean(logprobs, axis=-1)
    return jnp.mean(confidence * nll + smoothing * smooth)


if __name__ == "__main__":
    key = jax.random.PRNGKey(0)
    kx, kt, kx2, kt2 = jax.random.split(key, 4)

    # Case 1: f32, C not a multiple of 128 and N not a multiple of the row tile
    # (exercises the unpadded-C path and the ragged-last-tile row mask).
    N, C = 10, 37
    x = jax.random.normal(kx, (N, C), dtype=jnp.float32)
    target = jax.random.randint(kt, (N,), 0, C, dtype=jnp.int32)
    loss = label_smoothing_cross_entropy(x, target)
    jax.block_until_ready(loss)
    ref = _reference(x, target)
    assert jnp.allclose(loss, ref, atol=2e-5, rtol=1e-5), (loss, ref)

    # Case 2: bf16 logits (native-dtype DMA, in-kernel cast), 16-row alignment.
    N2, C2 = 24, 200
    x2 = jax.random.normal(kx2, (N2, C2), dtype=jnp.bfloat16)
    target2 = jax.random.randint(kt2, (N2,), 0, C2, dtype=jnp.int32)
    loss2 = label_smoothing_cross_entropy(x2, target2)
    jax.block_until_ready(loss2)
    ref2 = _reference(x2, target2)
    assert jnp.allclose(loss2, ref2, atol=1e-3, rtol=1e-3), (loss2, ref2)

    print("KERNEL_OK")
</pallas_src>

<mosaic_0001>
module attributes {stable_mosaic.version = 11 : i64} {
  func.func @_ls_ce_kernel(%arg0: i32, %arg1: memref<16x37xf32, #tpu.memory_space<vmem>>, %arg2: memref<16x1xi32, #tpu.memory_space<vmem>>, %arg3: memref<16x1xf32, #tpu.memory_space<vmem>>) attributes {dimension_semantics = [#tpu.dimension_semantics<parallel>], iteration_bounds = array<i64: 1>, scalar_prefetch = 0 : i64, scratch_operands = 0 : i64, tpu.core_type = #tpu.core_type<tc>, window_params = [{transform_indices = @transform_0, window_bounds = array<i64: 16, 37>}, {transform_indices = @transform_1, window_bounds = array<i64: 16, 1>}, {transform_indices = @transform_2, window_bounds = array<i64: 16, 1>}]} {
    %c0 = arith.constant 0 : index
    %c0_0 = arith.constant 0 : index
    %0 = vector.load %arg1[%c0, %c0_0] : memref<16x37xf32, #tpu.memory_space<vmem>>, vector<16x37xf32>
    %c0_1 = arith.constant 0 : index
    %c0_2 = arith.constant 0 : index
    %1 = vector.load %arg2[%c0_1, %c0_2] : memref<16x1xi32, #tpu.memory_space<vmem>>, vector<16x1xi32>
    %cst = arith.constant dense<0xFF800000> : vector<16xf32>
    %2 = vector.multi_reduction <maximumf>, %0, %cst [1] : vector<16x37xf32> to vector<16xf32>
    %3 = vector.shape_cast %2 : vector<16xf32> to vector<16x1xf32>
    %4 = vector.broadcast %3 : vector<16x1xf32> to vector<16x37xf32>
    %5 = arith.subf %0, %4 : vector<16x37xf32>
    %6 = math.exp %5 : vector<16x37xf32>
    %cst_3 = arith.constant dense<0.000000e+00> : vector<16xf32>
    %7 = vector.multi_reduction <add>, %6, %cst_3 [1] : vector<16x37xf32> to vector<16xf32>
    %8 = vector.shape_cast %7 : vector<16xf32> to vector<16x1xf32>
    %9 = math.log %8 : vector<16x1xf32>
    %10 = tpu.iota {dimensions = array<i32: 1>} : vector<16x37xi32>
    %11 = vector.broadcast %1 : vector<16x1xi32> to vector<16x37xi32>
    %12 = arith.cmpi eq, %10, %11 : vector<16x37xi32>
    %cst_4 = arith.constant 0.000000e+00 : f32
    %13 = vector.broadcast %cst_4 : f32 to vector<16x37xf32>
    %14 = arith.select %12, %0, %13 : vector<16x37xi1>, vector<16x37xf32>
    %cst_5 = arith.constant dense<0.000000e+00> : vector<16xf32>
    %15 = vector.multi_reduction <add>, %14, %cst_5 [1] : vector<16x37xf32> to vector<16xf32>
    %16 = vector.shape_cast %15 : vector<16xf32> to vector<16x1xf32>
    %cst_6 = arith.constant dense<0.000000e+00> : vector<16xf32>
    %17 = vector.multi_reduction <add>, %0, %cst_6 [1] : vector<16x37xf32> to vector<16xf32>
    %18 = vector.shape_cast %17 : vector<16xf32> to vector<16x1xf32>
    %19 = arith.addf %3, %9 : vector<16x1xf32>
    %cst_7 = arith.constant 0.899999976 : f32
    %20 = vector.broadcast %cst_7 : f32 to vector<16x1xf32>
    %21 = arith.mulf %20, %16 : vector<16x1xf32>
    %22 = arith.subf %19, %21 : vector<16x1xf32>
    %cst_8 = arith.constant 0.00270270277 : f32
    %23 = vector.broadcast %cst_8 : f32 to vector<16x1xf32>
    %24 = arith.mulf %23, %18 : vector<16x1xf32>
    %25 = arith.subf %22, %24 : vector<16x1xf32>
    %26 = tpu.iota {dimensions = array<i32: 0>} : vector<16x1xi32>
    %c16_i32 = arith.constant 16 : i32
    %27 = arith.muli %arg0, %c16_i32 : i32
    %28 = vector.broadcast %27 : i32 to vector<16x1xi32>
    %29 = arith.addi %26, %28 : vector<16x1xi32>
    %c10_i32 = arith.constant 10 : i32
    %30 = vector.broadcast %c10_i32 : i32 to vector<16x1xi32>
    %31 = arith.cmpi slt, %29, %30 : vector<16x1xi32>
    %cst_9 = arith.constant 0.000000e+00 : f32
    %32 = vector.broadcast %cst_9 : f32 to vector<16x1xf32>
    %33 = arith.select %31, %25, %32 : vector<16x1xi1>, vector<16x1xf32>
    %c0_10 = arith.constant 0 : index
    %c0_11 = arith.constant 0 : index
    %34 = vector.load %arg3[%c0_10, %c0_11] : memref<16x1xf32, #tpu.memory_space<vmem>>, vector<16x1xf32>
    tpu.vector_store %arg3[%c0_10, %c0_11], %33 {strides = array<i32>} : memref<16x1xf32, #tpu.memory_space<vmem>>, vector<16x1xf32>,
    return
  }
  func.func @transform_0(%arg0: i32) -> (i32, i32) {
    %c0_i32 = arith.constant 0 : i32
    %c0_i32_0 = arith.constant 0 : i32
    return %arg0, %c0_i32 : i32, i32
  }
  func.func @transform_1(%arg0: i32) -> (i32, i32) {
    %c0_i32 = arith.constant 0 : i32
    %c0_i32_0 = arith.constant 0 : i32
    return %arg0, %c0_i32 : i32, i32
  }
  func.func @transform_2(%arg0: i32) -> (i32, i32) {
    %c0_i32 = arith.constant 0 : i32
    %c0_i32_0 = arith.constant 0 : i32
    return %arg0, %c0_i32 : i32, i32
  }
}

</mosaic_0001>

<llo_original>
// kernel: tpu_custom_call.1
$region0: #{tpu_custom_call.1}
  #allocation0 [shape = 'u32[]', space=smem, size = 0x4, offset = 0x4, fixed_abs, tag = 'smem constant byte address 0x4 - core index']
  #allocation1 [shape = 'u32[144,128]{1,0:T(1,128)}', space=vmem, size = 0x12000, scoped, tag = 'internal scratch']
  %s0 = inlined_call_operand.vmem [shape: f32[10,37], index: 0, kind: input, shape index: {}]
  %s1 = inlined_call_operand.vmem [shape: s32[10,1], index: 1, kind: input, shape index: {}]
  %s2 = inlined_call_operand.vmem [shape: f32[16,1], index: 2, kind: output, shape index: {}]
  %s3 = sld [smem:[#allocation0]]
  $region18: #{tpu_custom_call.1} parent=0
    _
  %s5 = ssub.s32 1, %s3
  %s6 = scalar_select 0, %s5, %s3
  // Predicated region
  $region2: #{tpu_custom_call.1} parent=0 // pred_check
    _
  $region3: #{tpu_custom_call.1} parent=0 // pred_check_branch
    %8 = sbr.rel (0) target = $region5
  $region4: #{tpu_custom_call.1} parent=0 // pred_region
    _
  $region5: #{tpu_custom_call.1} parent=0 // pred_fallthru
    _
  // Predicated region
  $region6: #{tpu_custom_call.1} parent=0 // pred_check
    _
  $region7: #{tpu_custom_call.1} parent=0 // pred_check_branch
    %10 = sbr.rel (0) target = $region9
  $region8: #{tpu_custom_call.1} parent=0 // pred_region
    _
  $region9: #{tpu_custom_call.1} parent=0 // pred_fallthru
    _
  %v11 = vld [vmem:[%s0] sm:$0xff]
  %v12 = vld [vmem:[%s0 + $0x8] sm:$0xff]
  %v13 = vld [vmem:[%s1] sm:$0xff]
  %v14 = vld [vmem:[%s1 + $0x8] sm:$0xff]
  %vm15 = vcmask 302080
  %v16 = vsel %vm15, %v11, -inf
  %17 = vmax.xlane.f32.xlu0 %v16
  %v18 = vpop.xlane.xlu0 %17
  %v19 = vsel %vm15, %v12, -inf
  %20 = vmax.xlane.f32.xlu0 %v19
  %v21 = vpop.xlane.xlu0 %20
  %v22 = vsub.f32 %v11, %v18
  %v23 = vsub.f32 %v12, %v21
  %v24 = vmul.f32 %v22, 1.442695
  %v25 = vpow.pop %v24
  %v26 = vmul.f32 %v23, 1.442695
  %v27 = vpow.pop %v26
  %v28 = vsel %vm15, %v25, 0.0
  %29 = vadd.xlane.f32.xlu0 %v28
  %v30 = vpop.xlane.xlu0 %29
  %v31 = vsel %vm15, %v27, 0.0
  %32 = vadd.xlane.f32.xlu0 %v31
  %v33 = vpop.xlane.xlu0 %32
  %v34 = vlog2.pop %v30
  %v35 = vmul.f32 %v34, 0.6931472
  %v36 = vlog2.pop %v33
  %v37 = vmul.f32 %v36, 0.6931472
  %v38 = vlaneseq
  %v39 = vand.u32 %v38, 127
  %40 = vset.pattern.permute.xlu0 0
  %41 = vperm.xlu0 %40, %v13
  %v42 = vpop.permute.xlu0 %41
  %43 = vset.pattern.permute.xlu0 0
  %44 = vperm.xlu0 %43, %v14
  %v45 = vpop.permute.xlu0 %44
  %vm46 = vcmp.eq.s32.totalorder %v39, %v42
  %vm47 = vcmp.eq.s32.totalorder %v39, %v45
  %v48 = vsel %vm46, %v11, 0.0
  %v49 = vsel %vm47, %v12, 0.0
  %v50 = vsel %vm15, %v48, 0.0
  %51 = vadd.xlane.f32.xlu0 %v50
  %v52 = vpop.xlane.xlu0 %51
  %v53 = vsel %vm15, %v49, 0.0
  %54 = vadd.xlane.f32.xlu0 %v53
  %v55 = vpop.xlane.xlu0 %54
  %v56 = vsel %vm15, %v11, 0.0
  %57 = vadd.xlane.f32.xlu0 %v56
  %v58 = vpop.xlane.xlu0 %57
  %v59 = vsel %vm15, %v12, 0.0
  %60 = vadd.xlane.f32.xlu0 %v59
  %v61 = vpop.xlane.xlu0 %60
  %v62 = vadd.f32 %v18, %v35
  %v63 = vadd.f32 %v21, %v37
  %v64 = vmul.f32 %v52, 0.9
  %v65 = vmul.f32 %v55, 0.9
  %v66 = vsub.f32 %v62, %v64
  %v67 = vsub.f32 %v63, %v65
  %v68 = vmul.f32 %v58, 0.0027027028
  %v69 = vmul.f32 %v61, 0.0027027028
  %v70 = vsub.f32 %v66, %v68
  %v71 = vsub.f32 %v67, %v69
  %v72 = vlaneseq
  %v73 = vshrl.u32 %v72, 7
  %v74 = vadd.s32 %v73, 8
  %s75 = smul.u32 0, 16
  %v76 = vstv %s75
  %v77 = vadd.s32 %v73, %v76
  %v78 = vadd.s32 %v74, %v76
  %vm79 = vcmp.lt.s32.totalorder %v77, 10
  %vm80 = vcmp.lt.s32.totalorder %v78, 10
  %v81 = vsel %vm79, %v70, 0.0
  %v82 = vsel %vm80, %v71, 0.0
  %vm83 = vcmask 7168
  %84 = vst.msk [vmem:[%s2] sm:$0xff] %vm83, %v81
  %85 = vst.msk [vmem:[%s2 + $0x8] sm:$0xff] %vm83, %v82
  // Predicated region
  $region10: #{tpu_custom_call.1} parent=0 // pred_check
    _
  $region11: #{tpu_custom_call.1} parent=0 // pred_check_branch
    %87 = sbr.rel (0) target = $region13
  $region12: #{tpu_custom_call.1} parent=0 // pred_region
    _
  $region13: #{tpu_custom_call.1} parent=0 // pred_fallthru
    _
  // Predicated region
  $region14: #{tpu_custom_call.1} parent=0 // pred_check
    _
  $region15: #{tpu_custom_call.1} parent=0 // pred_check_branch
    %89 = sbr.rel (0) target = $region17
  $region16: #{tpu_custom_call.1} parent=0 // pred_region
    _
  $region17: #{tpu_custom_call.1} parent=0 // pred_fallthru
    _

</llo_original>
